<compile_context>
chip_gen: v7x
topology: tpu7x:2x2x1
jax: 0.10.0
libtpu: 0.0.40
codegen_flags: <defaults>
</compile_context>

<pallas_src>
import functools
import math

import jax
import jax.numpy as jnp
from jax import lax
from jax.experimental import pallas as pl
from jax.experimental.pallas import tpu as pltpu


# --------------------------------------------------------------------------- #
# Kernels
# --------------------------------------------------------------------------- #
def _lane_dense_kernel(x_ref, o_ref, *, two_n, n, m, b):
    """Path B: (tb, L) lane-dense block; affine applied only to 'var' lanes."""
    x = x_ref[...].astype(jnp.float32)
    col = lax.broadcasted_iota(jnp.int32, x.shape, dimension=1)
    is_var = (col % two_n) >= n
    y = jnp.where(is_var, x * jnp.float32(m) + jnp.float32(b), x)
    o_ref[...] = y.astype(o_ref.dtype)


def _var_half_kernel(v_ref, o_ref, *, m, b):
    """Path A: the input BlockSpec already selects the var half (n%128==0)."""
    v = v_ref[...].astype(jnp.float32)
    o_ref[...] = (v * jnp.float32(m) + jnp.float32(b)).astype(o_ref.dtype)


def _var_rowslice_kernel(x_ref, o_ref, *, n, m, b):
    """Path C: full (tb, 2n) row block, write only the affine var half."""
    v = x_ref[:, n:].astype(jnp.float32)
    o_ref[...] = (v * jnp.float32(m) + jnp.float32(b)).astype(o_ref.dtype)


# --------------------------------------------------------------------------- #
# Sizing helpers
# --------------------------------------------------------------------------- #
def _vmem_limit_bytes():
    """Per-generation VMEM budget: 3/4 of physical, capped at 96 MiB.
    v7x (64 MiB) -> 48 MiB; v5e/v6e (128 MiB) -> 96 MiB."""
    cap = 64 * 1024 * 1024  # conservative default if the query is unavailable
    try:
        cap = int(pltpu.get_tpu_info().vmem_capacity_bytes)
    except Exception:
        pass
    return int(min(96 * 1024 * 1024, (cap * 3) // 4))


def _pick_tile_rows(rows, in_lanes, out_lanes, itemsize, vmem_limit):
    """Padded-aware row-tile: the double-buffered (in + out) working set
    should use about half of the VMEM budget (headroom for the rest)."""
    sub = max(8, 32 // itemsize)                       # f32:8  bf16:16  int8:32
    pad = lambda lanes: ((lanes + 127) // 128) * 128   # lane padding to 128
    bytes_per_row = (pad(in_lanes) + pad(out_lanes)) * itemsize
    tb = (vmem_limit // 4) // max(bytes_per_row, 1)    # 2 bufs each, ~50% budget
    tb = max(sub, (tb // sub) * sub)                   # keep sublane multiple
    tb = min(tb, 1 << 16)
    return rows if rows <= tb else tb


def _compiler_params(vmem_limit):
    return pltpu.CompilerParams(
        dimension_semantics=("parallel",),
        vmem_limit_bytes=vmem_limit,
    )


# --------------------------------------------------------------------------- #
# Public wrapper
# --------------------------------------------------------------------------- #
def map_continuous_to_action(x, range_min=0.1, range_max=1.0, *,
                             use_pallas=None, tile_rows=None):
    """Returns (mean, var) with the same semantics as the PyTorch module."""
    two_n = x.shape[-1]
    assert two_n % 2 == 0, "last dim must be 2*N"
    n = two_n // 2

    # Linear map coefficients (tanh range is [-1, 1]).
    m = (range_max - range_min) / 2.0
    b = range_min + m

    lead = x.shape[:-1]
    batch = 1
    for d in lead:
        batch *= d

    itemsize = jnp.dtype(x.dtype).itemsize
    small = batch * two_n * itemsize < 256 * 1024
    if use_pallas is None:
        use_pallas = not small
    if (not use_pallas) or batch == 0:
        mean = x[..., :n]
        var = (x[..., n:].astype(jnp.float32) * m + b).astype(x.dtype)
        return mean, var

    vmem_limit = _vmem_limit_bytes()
    x2 = x.reshape(batch, two_n)

    # ---- Path A: large action dims (n % 128 == 0) -> read only the var half.
    if n % 128 == 0:
        tb = tile_rows or _pick_tile_rows(batch, n, n, itemsize, vmem_limit)
        tb = min(tb, batch)
        var2 = pl.pallas_call(
            functools.partial(_var_half_kernel, m=m, b=b),
            out_shape=jax.ShapeDtypeStruct((batch, n), x.dtype),
            grid=(pl.cdiv(batch, tb),),
            in_specs=[pl.BlockSpec((tb, n), lambda i: (i, 1))],   # columns n:2n
            out_specs=pl.BlockSpec((tb, n), lambda i: (i, 0)),
            compiler_params=_compiler_params(vmem_limit),
            cost_estimate=pl.CostEstimate(
                flops=2 * batch * n, transcendentals=0,
                bytes_accessed=2 * batch * n * itemsize),
        )(x2)
        return x[..., :n], var2.reshape(*lead, n)

    # ---- Path B: lane-dense reformulation for small two_n. -------------------
    L = (two_n * 128) // math.gcd(two_n, 128)    # lcm(two_n, 128)
    r = L // two_n
    if batch % r == 0:
        rows = batch // r
        xr = x2.reshape(rows, L)                 # contiguous -> free reshape
        tb = tile_rows or _pick_tile_rows(rows, L, L, itemsize, vmem_limit)
        tb = min(tb, rows)
        out = pl.pallas_call(
            functools.partial(_lane_dense_kernel, two_n=two_n, n=n, m=m, b=b),
            out_shape=jax.ShapeDtypeStruct((rows, L), x.dtype),
            grid=(pl.cdiv(rows, tb),),
            in_specs=[pl.BlockSpec((tb, L), lambda i: (i, 0))],
            out_specs=pl.BlockSpec((tb, L), lambda i: (i, 0)),
            compiler_params=_compiler_params(vmem_limit),
            cost_estimate=pl.CostEstimate(
                flops=2 * batch * two_n, transcendentals=0,
                bytes_accessed=2 * batch * two_n * itemsize),
        )(xr)
        out = out.reshape(*lead, two_n)
        # mean lanes pass through the kernel unchanged -> slice both from out.
        return out[..., :n], out[..., n:]

    # ---- Path C: generic fallback (full-row blocks, var-only output). --------
    tb = tile_rows or _pick_tile_rows(batch, two_n, n, itemsize, vmem_limit)
    tb = min(tb, batch)
    var2 = pl.pallas_call(
        functools.partial(_var_rowslice_kernel, n=n, m=m, b=b),
        out_shape=jax.ShapeDtypeStruct((batch, n), x.dtype),
        grid=(pl.cdiv(batch, tb),),
        in_specs=[pl.BlockSpec((tb, two_n), lambda i: (i, 0))],
        out_specs=pl.BlockSpec((tb, n), lambda i: (i, 0)),
        compiler_params=_compiler_params(vmem_limit),
        cost_estimate=pl.CostEstimate(
            flops=2 * batch * n, transcendentals=0,
            bytes_accessed=(batch * two_n + batch * n) * itemsize),
    )(x2)
    return x[..., :n], var2.reshape(*lead, n)


# --------------------------------------------------------------------------- #
# Reference + tests
# --------------------------------------------------------------------------- #
def _reference(x, range_min=0.1, range_max=1.0):
    n = x.shape[-1] // 2
    m = (range_max - range_min) / 2.0
    b = range_min + m
    return x[..., :n].astype(jnp.float32), x[..., n:].astype(jnp.float32) * m + b


if __name__ == "__main__":
    key = jax.random.PRNGKey(0)
    k1, k2, k3, k4, k5 = jax.random.split(key, 5)

    # --- Test 1: typical RL shape, lane-dense path (two_n=16 -> L=128, r=8) ---
    x1 = jnp.tanh(jax.random.normal(k1, (64, 16), dtype=jnp.float32))
    m1, v1 = map_continuous_to_action(x1, use_pallas=True)
    jax.block_until_ready((m1, v1))
    rm, rv = _reference(x1)
    assert m1.shape == (64, 8) and v1.shape == (64, 8)
    assert jnp.allclose(m1, rm, atol=1e-6)
    assert jnp.allclose(v1, rv, atol=1e-6)

    # --- Test 2: leading dims + multi-step grid with a partial last block -----
    x2 = jnp.tanh(jax.random.normal(k2, (2, 500, 16), dtype=jnp.float32))
    m2, v2 = map_continuous_to_action(x2, use_pallas=True, tile_rows=32)
    jax.block_until_ready((m2, v2))
    rm, rv = _reference(x2)
    assert m2.shape == (2, 500, 8) and v2.shape == (2, 500, 8)
    assert jnp.allclose(m2, rm, atol=1e-6)
    assert jnp.allclose(v2, rv, atol=1e-6)

    # --- Test 3: bf16 input through the lane-dense path -----------------------
    x3 = jnp.tanh(jax.random.normal(k3, (64, 16), dtype=jnp.float32)).astype(jnp.bfloat16)
    m3, v3 = map_continuous_to_action(x3, use_pallas=True)
    jax.block_until_ready((m3, v3))
    rm, rv = _reference(x3.astype(jnp.float32))
    assert jnp.allclose(m3.astype(jnp.float32), rm, atol=1e-2)
    assert jnp.allclose(v3.astype(jnp.float32), rv, atol=1e-2)

    # --- Test 4: large action dim (n % 128 == 0) -> var-half-only DMA path ----
    x4 = jnp.tanh(jax.random.normal(k4, (32, 256), dtype=jnp.float32))
    m4, v4 = map_continuous_to_action(x4, use_pallas=True)
    jax.block_until_ready((m4, v4))
    rm, rv = _reference(x4)
    assert m4.shape == (32, 128) and v4.shape == (32, 128)
    assert jnp.allclose(m4, rm, atol=1e-6)
    assert jnp.allclose(v4, rv, atol=1e-6)

    # --- Test 5: shape fitting neither structured path -> generic fallback ----
    x5 = jnp.tanh(jax.random.normal(k5, (37, 6), dtype=jnp.float32))
    m5, v5 = map_continuous_to_action(x5, use_pallas=True)
    jax.block_until_ready((m5, v5))
    rm, rv = _reference(x5)
    assert jnp.allclose(m5, rm, atol=1e-6)
    assert jnp.allclose(v5, rv, atol=1e-6)

    # --- Test 6: tiny-input auto-gate -> fused jnp path (no pallas_call) ------
    m6, v6 = map_continuous_to_action(x1)
    jax.block_until_ready((m6, v6))
    rm, rv = _reference(x1)
    assert jnp.allclose(m6, rm, atol=1e-6)
    assert jnp.allclose(v6, rv, atol=1e-6)

    print("KERNEL_OK")
</pallas_src>

<mosaic_0001>
module attributes {stable_mosaic.version = 11 : i64} {
  func.func @_lane_dense_kernel(%arg0: i32, %arg1: memref<8x128xf32, #tpu.memory_space<vmem>>, %arg2: memref<8x128xf32, #tpu.memory_space<vmem>>) attributes {dimension_semantics = [#tpu.dimension_semantics<parallel>], iteration_bounds = array<i64: 1>, scalar_prefetch = 0 : i64, scratch_operands = 0 : i64, tpu.core_type = #tpu.core_type<tc>, window_params = [{transform_indices = @transform_0, window_bounds = array<i64: 8, 128>}, {transform_indices = @transform_1, window_bounds = array<i64: 8, 128>}]} {
    %c0 = arith.constant 0 : index
    %c0_0 = arith.constant 0 : index
    %0 = vector.load %arg1[%c0, %c0_0] : memref<8x128xf32, #tpu.memory_space<vmem>>, vector<8x128xf32>
    %1 = tpu.iota {dimensions = array<i32: 1>} : vector<8x128xi32>
    %c16_i32 = arith.constant 16 : i32
    %c0_i32 = arith.constant 0 : i32
    %2 = arith.cmpi eq, %c16_i32, %c0_i32 : i32
    %c1_i32 = arith.constant 1 : i32
    %3 = arith.select %2, %c1_i32, %c16_i32 : i32
    %4 = vector.broadcast %3 : i32 to vector<8x128xi32>
    %5 = arith.remsi %1, %4 : vector<8x128xi32>
    %c0_i32_1 = arith.constant 0 : i32
    %6 = vector.broadcast %c0_i32_1 : i32 to vector<8x128xi32>
    %7 = arith.cmpi ne, %5, %6 : vector<8x128xi32>
    %c0_i32_2 = arith.constant 0 : i32
    %8 = vector.broadcast %c0_i32_2 : i32 to vector<8x128xi32>
    %9 = arith.cmpi slt, %5, %8 : vector<8x128xi32>
    %c0_i32_3 = arith.constant 0 : i32
    %10 = arith.cmpi slt, %3, %c0_i32_3 : i32
    %11 = vector.broadcast %10 : i1 to vector<8x128xi1>
    %12 = vector.broadcast %11 : vector<8x128xi1> to vector<8x128xi1>
    %13 = arith.xori %9, %12 : vector<8x128xi1>
    %14 = arith.andi %13, %7 : vector<8x128xi1>
    %15 = vector.broadcast %3 : i32 to vector<8x128xi32>
    %16 = arith.addi %5, %15 : vector<8x128xi32>
    %17 = arith.select %14, %16, %5 : vector<8x128xi1>, vector<8x128xi32>
    %c8_i32 = arith.constant 8 : i32
    %18 = vector.broadcast %c8_i32 : i32 to vector<8x128xi32>
    %19 = arith.cmpi sge, %17, %18 : vector<8x128xi32>
    %cst = arith.constant 4.500000e-01 : f32
    %20 = vector.broadcast %cst : f32 to vector<8x128xf32>
    %21 = arith.mulf %0, %20 : vector<8x128xf32>
    %cst_4 = arith.constant 5.500000e-01 : f32
    %22 = vector.broadcast %cst_4 : f32 to vector<8x128xf32>
    %23 = arith.addf %21, %22 : vector<8x128xf32>
    %24 = arith.select %19, %23, %0 : vector<8x128xi1>, vector<8x128xf32>
    %c0_5 = arith.constant 0 : index
    %c0_6 = arith.constant 0 : index
    %25 = vector.load %arg2[%c0_5, %c0_6] : memref<8x128xf32, #tpu.memory_space<vmem>>, vector<8x128xf32>
    tpu.vector_store %arg2[%c0_5, %c0_6], %24 {strides = array<i32>} : memref<8x128xf32, #tpu.memory_space<vmem>>, vector<8x128xf32>,
    return
  }
  func.func @transform_0(%arg0: i32) -> (i32, i32) {
    %c0_i32 = arith.constant 0 : i32
    %c0_i32_0 = arith.constant 0 : i32
    return %arg0, %c0_i32 : i32, i32
  }
  func.func @transform_1(%arg0: i32) -> (i32, i32) {
    %c0_i32 = arith.constant 0 : i32
    %c0_i32_0 = arith.constant 0 : i32
    return %arg0, %c0_i32 : i32, i32
  }
}

</mosaic_0001>

<llo_original>
// kernel: tpu_custom_call.1
$region0: #{tpu_custom_call.1}
  #allocation0 [shape = 'u32[]', space=smem, size = 0x4, offset = 0x4, fixed_abs, tag = 'smem constant byte address 0x4 - core index']
  #allocation1 [shape = 'u32[144,128]{1,0:T(1,128)}', space=vmem, size = 0x12000, scoped, tag = 'internal scratch']
  %s0 = inlined_call_operand.hbm [shape: f32[8,128], index: 0, kind: input, shape index: {}]
  %s1 = inlined_call_operand.hbm [shape: f32[8,128], index: 1, kind: output, shape index: {}]
  %s2 = sld [smem:[#allocation0]]
  $region18: #{tpu_custom_call.1} parent=0
    _
  %s4 = ssub.s32 1, %s2
  %s5 = scalar_select 0, %s4, %s2
  $region1: #{tpu_custom_call.1} parent=0
    #allocation2 [shape = 'u8[4096]{0}', space=vmem, size = 0x1000, scoped, tag = 'input window, operand 0, single buffered']
    #allocation3 [shape = 's32[1]{0}', space=sflag, size = 0x4, scoped, tag = 'scoped memory for tpu_custom_call.1']
    #allocation4 [shape = 's32[1]{0}', space=sflag, size = 0x4, scoped, tag = 'scoped memory for tpu_custom_call.1']
    #allocation5 [shape = 'u8[4096]{0}', space=vmem, size = 0x1000, scoped, tag = 'output window, operand 0, single buffered']
    %6 = vsyncpa [#allocation3], 0
    %7 = vsyncpa [#allocation4], 0
    // Predicated region
    $region2: #{tpu_custom_call.1} parent=1 // pred_check
      _
    $region3: #{tpu_custom_call.1} parent=1 // pred_check_branch
      %9 = sbr.rel (0) target = $region5
    $region4: #{tpu_custom_call.1} parent=1 // pred_region
      %s11 = ssub.s32 128, 128
      %12 = vsyncadd [#allocation3], %s11
      %s14 = sshll.u32 [#allocation2], 4
      %s15 = int_to_ptr.vmem [resolvable:$true] %s14
      %17 = dma.hbm_to_vmem [thread:$0]  %s0, 128, %s15, [#allocation3]
    $region5: #{tpu_custom_call.1} parent=1 // pred_fallthru
      _
    // Predicated region
    $region6: #{tpu_custom_call.1} parent=1 // pred_check
      _
    $region7: #{tpu_custom_call.1} parent=1 // pred_check_branch
      %19 = sbr.rel (0) target = $region9
    $region8: #{tpu_custom_call.1} parent=1 // pred_region
      %20 = dma.done [#allocation3], 128
    $region9: #{tpu_custom_call.1} parent=1 // pred_fallthru
      _
    %v21 = vld [vmem:[#allocation2] sm:$0xff]
    %v22 = vlaneseq
    %v23 = vand.u32 %v22, 127
    %vm24 = vcmp.lt.s32.totalorder %v23, 0
    %v25 = vsub.s32 0, %v23
    %v26 = vsel %vm24, %v25, %v23
    %v27 = vshrl.u32 %v26, 4
    %v28 = vand.u32 %v26, 15
    %v29 = vsub.s32 0, %v28
    %v30 = vsel %vm24, %v29, %v28
    %vm31 = vcmp.ne.s32.totalorder %v30, 0
    %vm32 = vcmp.lt.s32.totalorder %v30, 0
    %vm33 = vmand %vm32, %vm31
    %v34 = vadd.s32 %v30, 16
    %v35 = vsel %vm33, %v34, %v30
    %vm36 = vcmp.ge.s32.totalorder %v35, 8
    %v37 = vmul.f32 %v21, 0.45
    %v38 = vadd.f32 %v37, 0.55
    %v39 = vsel %vm36, %v38, %v21
    %40 = vst [vmem:[#allocation5] sm:$0xff] %v39
    // Predicated region
    $region10: #{tpu_custom_call.1} parent=1 // pred_check
      _
    $region11: #{tpu_custom_call.1} parent=1 // pred_check_branch
      %42 = sbr.rel (0) target = $region13
    $region12: #{tpu_custom_call.1} parent=1 // pred_region
      %s44 = ssub.s32 128, 128
      %45 = vsyncadd [#allocation4], %s44
      %s47 = sshll.u32 [#allocation5], 4
      %s48 = int_to_ptr.vmem [resolvable:$true] %s47
      %50 = dma.vmem_to_hbm [thread:$0]  %s48, 128, %s1, [#allocation4]
    $region13: #{tpu_custom_call.1} parent=1 // pred_fallthru
      _
    // Predicated region
    $region14: #{tpu_custom_call.1} parent=1 // pred_check
      _
    $region15: #{tpu_custom_call.1} parent=1 // pred_check_branch
      %52 = sbr.rel (0) target = $region17
    $region16: #{tpu_custom_call.1} parent=1 // pred_region
      %53 = dma.done [#allocation4], 128
    $region17: #{tpu_custom_call.1} parent=1 // pred_fallthru
      _
    %54 = vsyncpa [#allocation3], 1
    %55 = vsyncpa [#allocation4], 1

</llo_original>
